<compile_context>
chip_gen: v7x
topology: tpu7x:2x2x1
jax: 0.10.0
libtpu: 0.0.40
codegen_flags: <defaults>
</compile_context>

<pallas_src>
import functools

import jax
import jax.numpy as jnp
from jax.experimental import pallas as pl
from jax.experimental.pallas import tpu as pltpu


LANE = 128                            # lane width: keep feature dims lane-dense
DEFAULT_TILE = 1024                   # A_hat row/K tile for the streamed path
FUSED_MAX_NODES = 2048                # n_pad threshold for the single fused kernel (A bf16 <= 8 MiB)
RESIDENT_FEAT_MAX_BYTES = 8 * 2**20   # keep projected features VMEM-resident below this
TILED_VMEM_LIMIT = 32 * 2**20         # explicit scoped-VMEM limit (v5e default is only 16 MiB)


def _round_up(x, m):
    return ((x + m - 1) // m) * m


# --------------------------------------------------------------------------------------
# Fused single-kernel path (small graphs): A_hat resident in VMEM, both layers in-kernel.
# --------------------------------------------------------------------------------------
def _fused_kernel(a_ref, f_ref, b1_ref, w2_ref, b2_ref, out_ref):
    a = a_ref[...]                                                     # bf16, read once
    h = jnp.dot(a, f_ref[...], preferred_element_type=jnp.float32) + b1_ref[...]
    h = jnp.maximum(h, 0.0)                                            # layer-1 epilogue
    hw2 = jnp.dot(h.astype(jnp.bfloat16), w2_ref[...],
                  preferred_element_type=jnp.float32)                  # fused H @ W2
    out_ref[...] = (jnp.dot(a, hw2.astype(jnp.bfloat16),
                            preferred_element_type=jnp.float32)
                    + b2_ref[...])                                     # layer-2 aggregation


def _fused_forward(a_pad, xw1, b1_p, w2_bf, b2_p):
    n_pad = a_pad.shape[0]
    hid_pad = xw1.shape[1]
    out_pad = w2_bf.shape[1]
    a_bytes = n_pad * n_pad * 2
    vmem_limit = 2 * a_bytes + 16 * 2**20          # double-buffered A + headroom, <= 32 MiB
    return pl.pallas_call(
        _fused_kernel,
        out_shape=jax.ShapeDtypeStruct((n_pad, out_pad), jnp.float32),
        grid_spec=pltpu.PrefetchScalarGridSpec(
            num_scalar_prefetch=0,
            grid=(1,),
            in_specs=[
                pl.BlockSpec((n_pad, n_pad), lambda i: (0, 0)),     # A_hat (bf16), resident
                pl.BlockSpec((n_pad, hid_pad), lambda i: (0, 0)),   # X @ W1 (bf16)
                pl.BlockSpec((1, hid_pad), lambda i: (0, 0)),       # b1 (f32)
                pl.BlockSpec((hid_pad, out_pad), lambda i: (0, 0)),  # W2 (bf16)
                pl.BlockSpec((1, out_pad), lambda i: (0, 0)),       # b2 (f32)
            ],
            out_specs=pl.BlockSpec((n_pad, out_pad), lambda i: (0, 0)),
        ),
        compiler_params=pltpu.CompilerParams(
            dimension_semantics=("arbitrary",),
            vmem_limit_bytes=vmem_limit),
    )(a_pad, xw1, b1_p, w2_bf, b2_p)


# --------------------------------------------------------------------------------------
# Tiled two-kernel path (large graphs).
# --------------------------------------------------------------------------------------
def _layer1_kernel(a_ref, f_ref, b1_ref, w2_ref, out_ref, acc_ref, *, feat_resident, tk):
    """acc += A_tile @ XW1_tile; finalize: out = relu(acc + b1) @ W2 in bf16."""
    k = pl.program_id(1)

    @pl.when(k == 0)
    def _():
        acc_ref[...] = jnp.zeros_like(acc_ref)

    if feat_resident:
        start = pl.multiple_of(k * tk, tk)
        f = f_ref[pl.ds(start, tk), :]       # slab resident in VMEM; slice, no re-stream
    else:
        f = f_ref[...]
    acc_ref[...] += jnp.dot(a_ref[...], f, preferred_element_type=jnp.float32)

    @pl.when(k == pl.num_programs(1) - 1)
    def _():
        h = jnp.maximum(acc_ref[...] + b1_ref[...], 0.0)          # f32 epilogue
        out_ref[...] = jnp.dot(h.astype(jnp.bfloat16), w2_ref[...],
                               preferred_element_type=jnp.float32).astype(out_ref.dtype)


def _layer2_kernel(a_ref, f_ref, b2_ref, out_ref, *, feat_resident, tk):
    """Accumulate A_tile @ HW2_tile directly into the resident f32 output block."""
    k = pl.program_id(1)
    if feat_resident:
        start = pl.multiple_of(k * tk, tk)
        f = f_ref[pl.ds(start, tk), :]
    else:
        f = f_ref[...]
    contrib = jnp.dot(a_ref[...], f, preferred_element_type=jnp.float32)

    @pl.when(k == 0)
    def _():
        out_ref[...] = contrib + b2_ref[...]

    @pl.when(k > 0)
    def _():
        out_ref[...] += contrib


def _feat_spec(n_pad, f_pad, tk):
    """Resident (constant-index) feature slab when small, else streamed per K tile."""
    resident = n_pad * f_pad * 2 <= RESIDENT_FEAT_MAX_BYTES
    if resident:
        return resident, pl.BlockSpec((n_pad, f_pad), lambda i, k: (0, 0))
    return resident, pl.BlockSpec((tk, f_pad), lambda i, k: (k, 0))


def _layer1_tiled(a_pad, xw1, b1_p, w2_bf, *, tm, tk):
    n_pad = a_pad.shape[0]
    hid_pad = xw1.shape[1]
    out_pad = w2_bf.shape[1]
    feat_resident, f_spec = _feat_spec(n_pad, hid_pad, tk)
    kernel = functools.partial(_layer1_kernel, feat_resident=feat_resident, tk=tk)
    return pl.pallas_call(
        kernel,
        out_shape=jax.ShapeDtypeStruct((n_pad, out_pad), jnp.bfloat16),   # bf16 inter-layer
        grid_spec=pltpu.PrefetchScalarGridSpec(
            num_scalar_prefetch=0,
            grid=(n_pad // tm, n_pad // tk),
            in_specs=[
                pl.BlockSpec((tm, tk), lambda i, k: (i, k)),            # A_hat stream (bf16)
                f_spec,                                                  # X @ W1 (bf16)
                pl.BlockSpec((1, hid_pad), lambda i, k: (0, 0)),        # b1
                pl.BlockSpec((hid_pad, out_pad), lambda i, k: (0, 0)),  # W2 (bf16), resident
            ],
            out_specs=pl.BlockSpec((tm, out_pad), lambda i, k: (i, 0)),
            scratch_shapes=[pltpu.VMEM((tm, hid_pad), jnp.float32)],
        ),
        compiler_params=pltpu.CompilerParams(
            dimension_semantics=("parallel", "arbitrary"),
            vmem_limit_bytes=TILED_VMEM_LIMIT),
    )(a_pad, xw1, b1_p, w2_bf)


def _layer2_tiled(a_pad, hw2, b2_p, *, tm, tk):
    n_pad = a_pad.shape[0]
    out_pad = hw2.shape[1]
    feat_resident, f_spec = _feat_spec(n_pad, out_pad, tk)
    kernel = functools.partial(_layer2_kernel, feat_resident=feat_resident, tk=tk)
    return pl.pallas_call(
        kernel,
        out_shape=jax.ShapeDtypeStruct((n_pad, out_pad), jnp.float32),
        grid_spec=pltpu.PrefetchScalarGridSpec(
            num_scalar_prefetch=0,
            grid=(n_pad // tm, n_pad // tk),
            in_specs=[
                pl.BlockSpec((tm, tk), lambda i, k: (i, k)),         # A_hat stream (bf16)
                f_spec,                                               # H @ W2 (bf16)
                pl.BlockSpec((1, out_pad), lambda i, k: (0, 0)),     # b2
            ],
            out_specs=pl.BlockSpec((tm, out_pad), lambda i, k: (i, 0)),  # resident accumulator
        ),
        compiler_params=pltpu.CompilerParams(
            dimension_semantics=("parallel", "arbitrary"),
            vmem_limit_bytes=TILED_VMEM_LIMIT),
    )(a_pad, hw2, b2_p)


# --------------------------------------------------------------------------------------
# Forward wrapper.
# --------------------------------------------------------------------------------------
def prepare_adjacency(a_hat, *, fused_max=FUSED_MAX_NODES, tile=DEFAULT_TILE):
    """Pad + cast A_hat once per graph (hoisted out of the per-call forward).

    Cast to bf16 BEFORE padding so pad+convert fuse and no f32 N_pad^2 intermediate is
    materialized.
    """
    n = a_hat.shape[0]
    n_pad = _round_up(n, LANE)
    if n_pad > fused_max:
        n_pad = _round_up(n, tile)
    a_bf = a_hat.astype(jnp.bfloat16)
    return jnp.pad(a_bf, ((0, n_pad - n), (0, n_pad - n)))


def _gcn_forward_impl(a_pad, x, w1, b1, w2, b2, *, fused_max, tile):
    """Two GCNConv layers: relu(A_hat @ (X@W1) + b1), then A_hat @ (H@W2) + b2."""
    n, _ = x.shape
    n_pad = a_pad.shape[0]
    hidden_dim = w1.shape[1]
    output_dim = w2.shape[1]
    hid_pad = _round_up(hidden_dim, LANE)
    out_pad = _round_up(output_dim, LANE)

    # Tiny parameter / feature padding (lane-dense feature dims).
    x_p = jnp.pad(x, ((0, n_pad - n), (0, 0)))
    w1_p = jnp.pad(w1, ((0, 0), (0, hid_pad - hidden_dim)))
    b1_p = jnp.pad(b1.reshape(1, -1), ((0, 0), (0, hid_pad - hidden_dim)))
    w2_p = jnp.pad(w2, ((0, hid_pad - hidden_dim), (0, out_pad - output_dim)))
    b2_p = jnp.pad(b2.reshape(1, -1), ((0, 0), (0, out_pad - output_dim)))

    # Hoisted tiny projection (K = input_dim is small); bf16 operands, f32 accumulation
    # happens inside the kernels.
    xw1 = jnp.dot(x_p, w1_p).astype(jnp.bfloat16)
    w2_bf = w2_p.astype(jnp.bfloat16)

    if n_pad <= fused_max:
        # Small graph: A_hat resident in VMEM, both layers in one kernel.
        y = _fused_forward(a_pad, xw1, b1_p, w2_bf, b2_p)
    else:
        # Large graph: stream A_hat in big tiles, twice (once per layer).
        tm = tk = tile
        hw2 = _layer1_tiled(a_pad, xw1, b1_p, w2_bf, tm=tm, tk=tk)   # (n_pad, out_pad) bf16
        y = _layer2_tiled(a_pad, hw2, b2_p, tm=tm, tk=tk)            # (n_pad, out_pad) f32

    return y[:n, :output_dim]


gcn_forward = jax.jit(functools.partial(_gcn_forward_impl,
                                        fused_max=FUSED_MAX_NODES, tile=DEFAULT_TILE))


# --------------------------------------------------------------------------------------
# Graph construction helpers (dense equivalent of torch_geometric gcn_norm).
# --------------------------------------------------------------------------------------
def build_normalized_adjacency(edge_index, num_nodes):
    """Dense equivalent of gcn_norm with add_self_loops=True (duplicate edges accumulate)."""
    row, col = edge_index[0], edge_index[1]          # messages flow row (src) -> col (dst)
    a = jnp.zeros((num_nodes, num_nodes), jnp.float32)
    a = a.at[col, row].add(1.0)                      # a[dst, src] accumulates edge weight 1
    a = a + jnp.eye(num_nodes, dtype=jnp.float32)    # self loops
    deg = jnp.sum(a, axis=1)
    dinv = jnp.where(deg > 0, deg ** -0.5, 0.0)
    return dinv[:, None] * a * dinv[None, :]


def glorot(key, shape):
    fan_in, fan_out = shape
    limit = jnp.sqrt(6.0 / (fan_in + fan_out))
    return jax.random.uniform(key, shape, jnp.float32, -limit, limit)


if __name__ == "__main__":
    input_dim, hidden_dim, output_dim = 8, 32, 4

    def make_problem(key, n, e):
        kx, ksrc, kdst, kw1, kw2, kb1, kb2 = jax.random.split(key, 7)
        x = jax.random.normal(kx, (n, input_dim), jnp.float32)
        src = jax.random.randint(ksrc, (e,), 0, n)
        dst = jax.random.randint(kdst, (e,), 0, n)
        edge_index = jnp.stack([src, dst], axis=0)   # shape (2, E), like data.edge_index
        w1 = glorot(kw1, (input_dim, hidden_dim))
        b1 = 0.1 * jax.random.normal(kb1, (hidden_dim,), jnp.float32)
        w2 = glorot(kw2, (hidden_dim, output_dim))
        b2 = 0.1 * jax.random.normal(kb2, (output_dim,), jnp.float32)
        a_hat = build_normalized_adjacency(edge_index, n)
        return a_hat, x, w1, b1, w2, b2

    def reference(a_hat, x, w1, b1, w2, b2):
        h = jnp.maximum(a_hat @ (x @ w1) + b1[None, :], 0.0)
        return a_hat @ (h @ w2) + b2[None, :]

    key = jax.random.PRNGKey(0)
    k1, k2 = jax.random.split(key)

    # ---- Test 1: tiny graph (N=16) -> single fused kernel path (A_hat resident) ----
    a_hat, x, w1, b1, w2, b2 = make_problem(k1, 16, 32)
    a_pad = prepare_adjacency(a_hat)                       # hoisted pad + bf16 cast
    out = jax.block_until_ready(gcn_forward(a_pad, x, w1, b1, w2, b2))
    y_ref = reference(a_hat, x, w1, b1, w2, b2)
    assert out.shape == (16, output_dim)
    assert jnp.allclose(out, y_ref, atol=2e-2, rtol=2e-2), \
        float(jnp.max(jnp.abs(out - y_ref)))

    # ---- Test 2: force the streamed/tiled two-kernel path at small shapes (tile=128) ----
    a_hat, x, w1, b1, w2, b2 = make_problem(k2, 300, 900)
    gcn_forward_tiled = jax.jit(functools.partial(_gcn_forward_impl, fused_max=0, tile=128))
    a_pad = prepare_adjacency(a_hat, fused_max=0, tile=128)
    out = jax.block_until_ready(gcn_forward_tiled(a_pad, x, w1, b1, w2, b2))
    y_ref = reference(a_hat, x, w1, b1, w2, b2)
    assert out.shape == (300, output_dim)
    assert jnp.allclose(out, y_ref, atol=5e-2, rtol=5e-2), \
        float(jnp.max(jnp.abs(out - y_ref)))

    print("KERNEL_OK")
</pallas_src>

<mosaic_0001>
module attributes {stable_mosaic.version = 11 : i64} {
  func.func @_fused_kernel(%arg0: i32, %arg1: memref<128x128xbf16, #tpu.memory_space<vmem>>, %arg2: memref<128x128xbf16, #tpu.memory_space<vmem>>, %arg3: memref<1x128xf32, #tpu.memory_space<vmem>>, %arg4: memref<128x128xbf16, #tpu.memory_space<vmem>>, %arg5: memref<1x128xf32, #tpu.memory_space<vmem>>, %arg6: memref<128x128xf32, #tpu.memory_space<vmem>>) attributes {dimension_semantics = [#tpu.dimension_semantics<arbitrary>], iteration_bounds = array<i64: 1>, scalar_prefetch = 0 : i64, scratch_operands = 0 : i64, tpu.core_type = #tpu.core_type<tc>, window_params = [{pipeline_mode = #tpu.pipeline_mode<synchronous>, transform_indices = @transform_0, window_bounds = array<i64: 128, 128>}, {pipeline_mode = #tpu.pipeline_mode<synchronous>, transform_indices = @transform_1, window_bounds = array<i64: 128, 128>}, {pipeline_mode = #tpu.pipeline_mode<synchronous>, transform_indices = @transform_2, window_bounds = array<i64: 1, 128>}, {pipeline_mode = #tpu.pipeline_mode<synchronous>, transform_indices = @transform_3, window_bounds = array<i64: 128, 128>}, {pipeline_mode = #tpu.pipeline_mode<synchronous>, transform_indices = @transform_4, window_bounds = array<i64: 1, 128>}, {pipeline_mode = #tpu.pipeline_mode<synchronous>, transform_indices = @transform_5, window_bounds = array<i64: 128, 128>}]} {
    %c0 = arith.constant 0 : index
    %c0_0 = arith.constant 0 : index
    %0 = vector.load %arg1[%c0, %c0_0] : memref<128x128xbf16, #tpu.memory_space<vmem>>, vector<128x128xbf16>
    %c0_1 = arith.constant 0 : index
    %c0_2 = arith.constant 0 : index
    %1 = vector.load %arg2[%c0_1, %c0_2] : memref<128x128xbf16, #tpu.memory_space<vmem>>, vector<128x128xbf16>
    %cst = arith.constant dense<0.000000e+00> : vector<128x128xf32>
    %2 = tpu.matmul %0, %1, %cst {dimension_numbers = #tpu.dot_dimension_numbers<[1], [0], [0], [1], [0, 0, 1, 1], [], []>} : vector<128x128xbf16>, vector<128x128xbf16>, vector<128x128xf32> -> vector<128x128xf32>
    %c0_3 = arith.constant 0 : index
    %c0_4 = arith.constant 0 : index
    %3 = vector.load %arg3[%c0_3, %c0_4] : memref<1x128xf32, #tpu.memory_space<vmem>>, vector<1x128xf32>
    %4 = vector.broadcast %3 : vector<1x128xf32> to vector<128x128xf32>
    %5 = arith.addf %2, %4 : vector<128x128xf32>
    %cst_5 = arith.constant 0.000000e+00 : f32
    %6 = vector.broadcast %cst_5 : f32 to vector<128x128xf32>
    %7 = arith.maximumf %5, %6 : vector<128x128xf32>
    %8 = arith.truncf %7 : vector<128x128xf32> to vector<128x128xbf16>
    %c0_6 = arith.constant 0 : index
    %c0_7 = arith.constant 0 : index
    %9 = vector.load %arg4[%c0_6, %c0_7] : memref<128x128xbf16, #tpu.memory_space<vmem>>, vector<128x128xbf16>
    %cst_8 = arith.constant dense<0.000000e+00> : vector<128x128xf32>
    %10 = tpu.matmul %8, %9, %cst_8 {dimension_numbers = #tpu.dot_dimension_numbers<[1], [0], [0], [1], [0, 0, 1, 1], [], []>} : vector<128x128xbf16>, vector<128x128xbf16>, vector<128x128xf32> -> vector<128x128xf32>
    %11 = arith.truncf %10 : vector<128x128xf32> to vector<128x128xbf16>
    %cst_9 = arith.constant dense<0.000000e+00> : vector<128x128xf32>
    %12 = tpu.matmul %0, %11, %cst_9 {dimension_numbers = #tpu.dot_dimension_numbers<[1], [0], [0], [1], [0, 0, 1, 1], [], []>} : vector<128x128xbf16>, vector<128x128xbf16>, vector<128x128xf32> -> vector<128x128xf32>
    %c0_10 = arith.constant 0 : index
    %c0_11 = arith.constant 0 : index
    %13 = vector.load %arg5[%c0_10, %c0_11] : memref<1x128xf32, #tpu.memory_space<vmem>>, vector<1x128xf32>
    %14 = vector.broadcast %13 : vector<1x128xf32> to vector<128x128xf32>
    %15 = arith.addf %12, %14 : vector<128x128xf32>
    %c0_12 = arith.constant 0 : index
    %c0_13 = arith.constant 0 : index
    %16 = vector.load %arg6[%c0_12, %c0_13] : memref<128x128xf32, #tpu.memory_space<vmem>>, vector<128x128xf32>
    tpu.vector_store %arg6[%c0_12, %c0_13], %15 {strides = array<i32>} : memref<128x128xf32, #tpu.memory_space<vmem>>, vector<128x128xf32>,
    return
  }
  func.func @transform_0(%arg0: i32) -> (i32, i32) {
    %c0_i32 = arith.constant 0 : i32
    %c0_i32_0 = arith.constant 0 : i32
    %c0_i32_1 = arith.constant 0 : i32
    return %c0_i32, %c0_i32_0 : i32, i32
  }
  func.func @transform_1(%arg0: i32) -> (i32, i32) {
    %c0_i32 = arith.constant 0 : i32
    %c0_i32_0 = arith.constant 0 : i32
    %c0_i32_1 = arith.constant 0 : i32
    return %c0_i32, %c0_i32_0 : i32, i32
  }
  func.func @transform_2(%arg0: i32) -> (i32, i32) {
    %c0_i32 = arith.constant 0 : i32
    %c0_i32_0 = arith.constant 0 : i32
    %c0_i32_1 = arith.constant 0 : i32
    return %c0_i32, %c0_i32_0 : i32, i32
  }
  func.func @transform_3(%arg0: i32) -> (i32, i32) {
    %c0_i32 = arith.constant 0 : i32
    %c0_i32_0 = arith.constant 0 : i32
    %c0_i32_1 = arith.constant 0 : i32
    return %c0_i32, %c0_i32_0 : i32, i32
  }
  func.func @transform_4(%arg0: i32) -> (i32, i32) {
    %c0_i32 = arith.constant 0 : i32
    %c0_i32_0 = arith.constant 0 : i32
    %c0_i32_1 = arith.constant 0 : i32
    return %c0_i32, %c0_i32_0 : i32, i32
  }
  func.func @transform_5(%arg0: i32) -> (i32, i32) {
    %c0_i32 = arith.constant 0 : i32
    %c0_i32_0 = arith.constant 0 : i32
    %c0_i32_1 = arith.constant 0 : i32
    return %c0_i32, %c0_i32_0 : i32, i32
  }
}

</mosaic_0001>

<llo_original>
// kernel: _gcn_forward_impl.1
$region0: #{_gcn_forward_impl.1}
  #allocation0 [shape = 'u32[]', space=smem, size = 0x4, offset = 0x4, fixed_abs, tag = 'smem constant byte address 0x4 - core index']
  #allocation1 [shape = 'u32[144,128]{1,0:T(1,128)}', space=vmem, size = 0x12000, scoped, tag = 'internal scratch']
  %s0 = inlined_call_operand.vmem [shape: bf16[128,128], index: 0, kind: input, shape index: {}]
  %s1 = inlined_call_operand.vmem [shape: bf16[128,128], index: 1, kind: input, shape index: {}]
  %s2 = inlined_call_operand.vmem [shape: f32[1,128], index: 2, kind: input, shape index: {}]
  %s3 = inlined_call_operand.vmem [shape: bf16[128,128], index: 3, kind: input, shape index: {}]
  %s4 = inlined_call_operand.vmem [shape: f32[1,128], index: 4, kind: input, shape index: {}]
  %s5 = inlined_call_operand.vmem [shape: f32[128,128], index: 5, kind: output, shape index: {}]
  %s6 = sld [smem:[#allocation0]]
  $region30: #{_gcn_forward_impl.1} parent=0
    _
  %s8 = ssub.s32 1, %s6
  %s9 = scalar_select 0, %s8, %s6
  // Predicated region
  $region2: #{_gcn_forward_impl.1} parent=0 // pred_check
    _
  $region3: #{_gcn_forward_impl.1} parent=0 // pred_check_branch
    %11 = sbr.rel (0) target = $region5
  $region4: #{_gcn_forward_impl.1} parent=0 // pred_region
    _
  $region5: #{_gcn_forward_impl.1} parent=0 // pred_fallthru
    _
  // Predicated region
  $region6: #{_gcn_forward_impl.1} parent=0 // pred_check
    _
  $region7: #{_gcn_forward_impl.1} parent=0 // pred_check_branch
    %13 = sbr.rel (0) target = $region9
  $region8: #{_gcn_forward_impl.1} parent=0 // pred_region
    _
  $region9: #{_gcn_forward_impl.1} parent=0 // pred_fallthru
    _
  // Predicated region
  $region10: #{_gcn_forward_impl.1} parent=0 // pred_check
    _
  $region11: #{_gcn_forward_impl.1} parent=0 // pred_check_branch
    %15 = sbr.rel (0) target = $region13
  $region12: #{_gcn_forward_impl.1} parent=0 // pred_region
    _
  $region13: #{_gcn_forward_impl.1} parent=0 // pred_fallthru
    _
  // Predicated region
  $region14: #{_gcn_forward_impl.1} parent=0 // pred_check
    _
  $region15: #{_gcn_forward_impl.1} parent=0 // pred_check_branch
    %17 = sbr.rel (0) target = $region17
  $region16: #{_gcn_forward_impl.1} parent=0 // pred_region
    _
  $region17: #{_gcn_forward_impl.1} parent=0 // pred_fallthru
    _
  // Predicated region
  $region18: #{_gcn_forward_impl.1} parent=0 // pred_check
    _
  $region19: #{_gcn_forward_impl.1} parent=0 // pred_check_branch
    %19 = sbr.rel (0) target = $region21
  $region20: #{_gcn_forward_impl.1} parent=0 // pred_region
    _
  $region21: #{_gcn_forward_impl.1} parent=0 // pred_fallthru
    _
  %v21 = vld [vmem:[%s0] sm:$0xf]
  %v22 = vld [vmem:[%s0 + $0x4] sm:$0xf]
  %v23 = vld [vmem:[%s0 + $0x8] sm:$0xf]
  %v24 = vld [vmem:[%s0 + $0xc] sm:$0xf]
  %v25 = vld [vmem:[%s0 + $0x10] sm:$0xf]
  %v26 = vld [vmem:[%s0 + $0x14] sm:$0xf]
  %v27 = vld [vmem:[%s0 + $0x18] sm:$0xf]
  %v28 = vld [vmem:[%s0 + $0x1c] sm:$0xf]
  %v29 = vld [vmem:[%s0 + $0x20] sm:$0xf]
  %v30 = vld [vmem:[%s0 + $0x24] sm:$0xf]
  %v31 = vld [vmem:[%s0 + $0x28] sm:$0xf]
  %v32 = vld [vmem:[%s0 + $0x2c] sm:$0xf]
  %v33 = vld [vmem:[%s0 + $0x30] sm:$0xf]
  %v34 = vld [vmem:[%s0 + $0x34] sm:$0xf]
  %v35 = vld [vmem:[%s0 + $0x38] sm:$0xf]
  %v36 = vld [vmem:[%s0 + $0x3c] sm:$0xf]
  %v37 = vld [vmem:[%s1] sm:$0xf]
  %v38 = vld [vmem:[%s1 + $0x4] sm:$0xf]
  %v39 = vld [vmem:[%s1 + $0x8] sm:$0xf]
  %v40 = vld [vmem:[%s1 + $0xc] sm:$0xf]
  %v41 = vld [vmem:[%s1 + $0x10] sm:$0xf]
  %v42 = vld [vmem:[%s1 + $0x14] sm:$0xf]
  %v43 = vld [vmem:[%s1 + $0x18] sm:$0xf]
  %v44 = vld [vmem:[%s1 + $0x1c] sm:$0xf]
  %v45 = vld [vmem:[%s1 + $0x20] sm:$0xf]
  %v46 = vld [vmem:[%s1 + $0x24] sm:$0xf]
  %v47 = vld [vmem:[%s1 + $0x28] sm:$0xf]
  %v48 = vld [vmem:[%s1 + $0x2c] sm:$0xf]
  %v49 = vld [vmem:[%s1 + $0x30] sm:$0xf]
  %v50 = vld [vmem:[%s1 + $0x34] sm:$0xf]
  %v51 = vld [vmem:[%s1 + $0x38] sm:$0xf]
  %v52 = vld [vmem:[%s1 + $0x3c] sm:$0xf]
  %v53 = vld [vmem:[%s2] sm:$0x1]
  %v55 = vlaneseq
  %v56 = vshrl.u32 %v55, 7
  %v57 = vsub.s32 0, %v56
  %v58 = vrot.slane %v53, %v57
  %v76 = vunpack.c.l.b16 %v21
  %v77 = vunpack.c.l.b16 %v22
  %v78 = vunpack.c.l.b16 %v23
  %v79 = vunpack.c.l.b16 %v24
  %v80 = vunpack.c.l.b16 %v25
  %v81 = vunpack.c.l.b16 %v26
  %v82 = vunpack.c.l.b16 %v27
  %v83 = vunpack.c.l.b16 %v28
  %v84 = vunpack.c.l.b16 %v29
  %v85 = vunpack.c.l.b16 %v30
  %v86 = vunpack.c.l.b16 %v31
  %v87 = vunpack.c.l.b16 %v32
  %v88 = vunpack.c.l.b16 %v33
  %v89 = vunpack.c.l.b16 %v34
  %v90 = vunpack.c.l.b16 %v35
  %v91 = vunpack.c.l.b16 %v36
  %v92 = vpack.c.b16 %v77, %v76
  %v93 = vpack.c.b16 %v79, %v78
  %v94 = vpack.c.b16 %v81, %v80
  %v95 = vpack.c.b16 %v83, %v82
  %v96 = vpack.c.b16 %v85, %v84
  %v97 = vpack.c.b16 %v87, %v86
  %v98 = vpack.c.b16 %v89, %v88
  %v99 = vpack.c.b16 %v91, %v90
  %v124 = vunpack.c.l.b16 %v37
  %v125 = vunpack.c.l.b16 %v38
  %v126 = vunpack.c.l.b16 %v39
  %v127 = vunpack.c.l.b16 %v40
  %v128 = vunpack.c.l.b16 %v41
  %v129 = vunpack.c.l.b16 %v42
  %v130 = vunpack.c.l.b16 %v43
  %v131 = vunpack.c.l.b16 %v44
  %v132 = vunpack.c.l.b16 %v45
  %v133 = vunpack.c.l.b16 %v46
  %v134 = vunpack.c.l.b16 %v47
  %v135 = vunpack.c.l.b16 %v48
  %v136 = vunpack.c.l.b16 %v49
  %v137 = vunpack.c.l.b16 %v50
  %v138 = vunpack.c.l.b16 %v51
  %v139 = vunpack.c.l.b16 %v52
  %v140 = vpack.c.b16 %v125, %v124
  %v141 = vpack.c.b16 %v127, %v126
  %v142 = vpack.c.b16 %v129, %v128
  %v143 = vpack.c.b16 %v131, %v130
  %v144 = vpack.c.b16 %v133, %v132
  %v145 = vpack.c.b16 %v135, %v134
  %v146 = vpack.c.b16 %v137, %v136
  %v147 = vpack.c.b16 %v139, %v138
  %156 = vmatprep.subr.bf16.mxu0 0
  %157 = vmatpush1.bf16.msra.mxu0 %v140
  %158 = vmatprep.subr.bf16.mxu0 0
  %159 = vmatpush1.bf16.msra.mxu0 %v141
  %160 = vmatprep.subr.bf16.mxu0 0
  %161 = vmatpush1.bf16.msra.mxu0 %v142
  %162 = vmatprep.subr.bf16.mxu0 0
  %163 = vmatpush1.bf16.msra.mxu0 %v143
  %164 = vmatprep.subr.bf16.mxu0 0
  %165 = vmatpush1.bf16.msra.mxu0 %v144
  %166 = vmatprep.subr.bf16.mxu0 0
  %167 = vmatpush1.bf16.msra.mxu0 %v145
  %168 = vmatprep.subr.bf16.mxu0 0
  %169 = vmatpush1.bf16.msra.mxu0 %v146
  %170 = vmatprep.subr.bf16.mxu0 0
  %171 = vmatpush1.bf16.msra.mxu0 %v147
  %172 = vmatprep.subr.bf16.mxu0 0
  %173 = vmatpush1.bf16.msra.mxu0 0
  %174 = vmatprep.subr.bf16.mxu0 0
  %175 = vmatpush1.bf16.msra.mxu0 0
  %176 = vmatprep.subr.bf16.mxu0 0
  %177 = vmatpush1.bf16.msra.mxu0 0
  %178 = vmatprep.subr.bf16.mxu0 0
  %179 = vmatpush1.bf16.msra.mxu0 0
  %180 = vmatprep.subr.bf16.mxu0 0
  %181 = vmatpush1.bf16.msra.mxu0 0
  %182 = vmatprep.subr.bf16.mxu0 0
  %183 = vmatpush1.bf16.msra.mxu0 0
  %184 = vmatprep.subr.bf16.mxu0 0
  %185 = vmatpush1.bf16.msra.mxu0 0
  %186 = vmatprep.subr.bf16.mxu0 0
  %187 = vmatpush1.bf16.msra.mxu0 0
  %188 = vmatprep.mubr.bf16.mxu0 0
  %189 = vmatmul.mubr.bf16.gmra.mrb[0].mxu0 %v92
  %v190 = vpop.f32.mrb[0].mxu0
  %v191 = vadd.f32 %v58, %v190
  %v192 = vpop.f32.mrb[0].mxu0
  %v193 = vpop.f32.mrb[0].mxu0
  %v194 = vadd.f32 %v58, %v193
  %v195 = vpop.f32.mrb[0].mxu0
  %196 = vmatprep.mubr.bf16.mxu0 0
  %197 = vmatmul.mubr.bf16.gmra.mrb[0].mxu0 %v93
  %v198 = vpop.f32.mrb[0].mxu0
  %v199 = vadd.f32 %v58, %v198
  %v200 = vpop.f32.mrb[0].mxu0
  %v201 = vpop.f32.mrb[0].mxu0
  %v202 = vadd.f32 %v58, %v201
  %v203 = vpop.f32.mrb[0].mxu0
  %204 = vmatprep.mubr.bf16.mxu0 0
  %205 = vmatmul.mubr.bf16.gmra.mrb[0].mxu0 %v94
  %v206 = vpop.f32.mrb[0].mxu0
  %v207 = vadd.f32 %v58, %v206
  %v208 = vpop.f32.mrb[0].mxu0
  %v209 = vpop.f32.mrb[0].mxu0
  %v210 = vadd.f32 %v58, %v209
  %v211 = vpop.f32.mrb[0].mxu0
  %212 = vmatprep.mubr.bf16.mxu0 0
  %213 = vmatmul.mubr.bf16.gmra.mrb[0].mxu0 %v95
  %v214 = vpop.f32.mrb[0].mxu0
  %v215 = vadd.f32 %v58, %v214
  %v216 = vpop.f32.mrb[0].mxu0
  %v217 = vpop.f32.mrb[0].mxu0
  %v218 = vadd.f32 %v58, %v217
  %v219 = vpop.f32.mrb[0].mxu0
  %220 = vmatprep.mubr.bf16.mxu0 0
  %221 = vmatmul.mubr.bf16.gmra.mrb[0].mxu0 %v96
  %v222 = vpop.f32.mrb[0].mxu0
  %v223 = vadd.f32 %v58, %v222
  %v224 = vpop.f32.mrb[0].mxu0
  %v225 = vpop.f32.mrb[0].mxu0
  %v226 = vadd.f32 %v58, %v225
  %v227 = vpop.f32.mrb[0].mxu0
  %228 = vmatprep.mubr.bf16.mxu0 0
  %229 = vmatmul.mubr.bf16.gmra.mrb[0].mxu0 %v97
  %v230 = vpop.f32.mrb[0].mxu0
  %v231 = vadd.f32 %v58, %v230
  %v232 = vpop.f32.mrb[0].mxu0
  %v233 = vpop.f32.mrb[0].mxu0
  %v234 = vadd.f32 %v58, %v233
  %v235 = vpop.f32.mrb[0].mxu0
  %236 = vmatprep.mubr.bf16.mxu0 0
  %237 = vmatmul.mubr.bf16.gmra.mrb[0].mxu0 %v98
  %v238 = vpop.f32.mrb[0].mxu0
  %v239 = vadd.f32 %v58, %v238
  %v240 = vpop.f32.mrb[0].mxu0
  %v241 = vpop.f32.mrb[0].mxu0
  %v242 = vadd.f32 %v58, %v241
  %v243 = vpop.f32.mrb[0].mxu0
  %244 = vmatprep.mubr.bf16.mxu0 0
  %245 = vmatmul.mubr.bf16.gmra.mrb[0].mxu0 %v99
  %v246 = vpop.f32.mrb[0].mxu0
  %v247 = vadd.f32 %v58, %v246
  %v248 = vpop.f32.mrb[0].mxu0
  %v249 = vpop.f32.mrb[0].mxu0
  %v250 = vadd.f32 %v58, %v249
  %v251 = vpop.f32.mrb[0].mxu0
  %252 = vdwg.mxu0
  %v253 = vmax.f32 %v191, 0.0
  %v254 = vmax.f32 %v194, 0.0
  %v255 = vmax.f32 %v199, 0.0
  %v256 = vmax.f32 %v202, 0.0
  %v257 = vmax.f32 %v207, 0.0
  %v258 = vmax.f32 %v210, 0.0
  %v259 = vmax.f32 %v215, 0.0
  %v260 = vmax.f32 %v218, 0.0
  %v261 = vmax.f32 %v223, 0.0
  %v262 = vmax.f32 %v226, 0.0
  %v263 = vmax.f32 %v231, 0.0
  %v264 = vmax.f32 %v234, 0.0
  %v265 = vmax.f32 %v239, 0.0
  %v266 = vmax.f32 %v242, 0.0
  %v267 = vmax.f32 %v247, 0.0
  %v268 = vmax.f32 %v250, 0.0
  %v269 = vpack.c.bf16 %v254, %v253
  %v270 = vpack.c.bf16 %v256, %v255
  %v271 = vpack.c.bf16 %v258, %v257
  %v272 = vpack.c.bf16 %v260, %v259
  %v273 = vpack.c.bf16 %v262, %v261
  %v274 = vpack.c.bf16 %v264, %v263
  %v275 = vpack.c.bf16 %v266, %v265
  %v276 = vpack.c.bf16 %v268, %v267
  %v277 = vld [vmem:[%s3] sm:$0xf]
  %v278 = vld [vmem:[%s3 + $0x4] sm:$0xf]
  %v279 = vld [vmem:[%s3 + $0x8] sm:$0xf]
  %v280 = vld [vmem:[%s3 + $0xc] sm:$0xf]
  %v281 = vld [vmem:[%s3 + $0x10] sm:$0xf]
  %v282 = vld [vmem:[%s3 + $0x14] sm:$0xf]
  %v283 = vld [vmem:[%s3 + $0x18] sm:$0xf]
  %v284 = vld [vmem:[%s3 + $0x1c] sm:$0xf]
  %v285 = vld [vmem:[%s3 + $0x20] sm:$0xf]
  %v286 = vld [vmem:[%s3 + $0x24] sm:$0xf]
  %v287 = vld [vmem:[%s3 + $0x28] sm:$0xf]
  %v288 = vld [vmem:[%s3 + $0x2c] sm:$0xf]
  %v289 = vld [vmem:[%s3 + $0x30] sm:$0xf]
  %v290 = vld [vmem:[%s3 + $0x34] sm:$0xf]
  %v291 = vld [vmem:[%s3 + $0x38] sm:$0xf]
  %v292 = vld [vmem:[%s3 + $0x3c] sm:$0xf]
  %v309 = vunpack.c.l.b16 %v277
  %v310 = vunpack.c.l.b16 %v278
  %v311 = vunpack.c.l.b16 %v279
  %v312 = vunpack.c.l.b16 %v280
  %v313 = vunpack.c.l.b16 %v281
  %v314 = vunpack.c.l.b16 %v282
  %v315 = vunpack.c.l.b16 %v283
  %v316 = vunpack.c.l.b16 %v284
  %v317 = vunpack.c.l.b16 %v285
  %v318 = vunpack.c.l.b16 %v286
  %v319 = vunpack.c.l.b16 %v287
  %v320 = vunpack.c.l.b16 %v288
  %v321 = vunpack.c.l.b16 %v289
  %v322 = vunpack.c.l.b16 %v290
  %v323 = vunpack.c.l.b16 %v291
  %v324 = vunpack.c.l.b16 %v292
  %v325 = vpack.c.b16 %v310, %v309
  %v326 = vpack.c.b16 %v312, %v311
  %v327 = vpack.c.b16 %v314, %v313
  %v328 = vpack.c.b16 %v316, %v315
  %v329 = vpack.c.b16 %v318, %v317
  %v330 = vpack.c.b16 %v320, %v319
  %v331 = vpack.c.b16 %v322, %v321
  %v332 = vpack.c.b16 %v324, %v323
  %341 = vmatprep.subr.bf16.mxu0 0
  %342 = vmatpush1.bf16.msra.mxu0 %v325
  %343 = vmatprep.subr.bf16.mxu0 0
  %344 = vmatpush1.bf16.msra.mxu0 %v326
  %345 = vmatprep.subr.bf16.mxu0 0
  %346 = vmatpush1.bf16.msra.mxu0 %v327
  %347 = vmatprep.subr.bf16.mxu0 0
  %348 = vmatpush1.bf16.msra.mxu0 %v328
  %349 = vmatprep.subr.bf16.mxu0 0
  %350 = vmatpush1.bf16.msra.mxu0 %v329
  %351 = vmatprep.subr.bf16.mxu0 0
  %352 = vmatpush1.bf16.msra.mxu0 %v330
  %353 = vmatprep.subr.bf16.mxu0 0
  %354 = vmatpush1.bf16.msra.mxu0 %v331
  %355 = vmatprep.subr.bf16.mxu0 0
  %356 = vmatpush1.bf16.msra.mxu0 %v332
  %357 = vmatprep.subr.bf16.mxu0 0
  %358 = vmatpush1.bf16.msra.mxu0 0
  %359 = vmatprep.subr.bf16.mxu0 0
  %360 = vmatpush1.bf16.msra.mxu0 0
  %361 = vmatprep.subr.bf16.mxu0 0
  %362 = vmatpush1.bf16.msra.mxu0 0
  %363 = vmatprep.subr.bf16.mxu0 0
  %364 = vmatpush1.bf16.msra.mxu0 0
  %365 = vmatprep.subr.bf16.mxu0 0
  %366 = vmatpush1.bf16.msra.mxu0 0
  %367 = vmatprep.subr.bf16.mxu0 0
  %368 = vmatpush1.bf16.msra.mxu0 0
  %369 = vmatprep.subr.bf16.mxu0 0
  %370 = vmatpush1.bf16.msra.mxu0 0
  %371 = vmatprep.subr.bf16.mxu0 0
  %372 = vmatpush1.bf16.msra.mxu0 0
  %373 = vmatprep.mubr.bf16.mxu0 0
  %374 = vmatmul.mubr.bf16.gmra.mrb[0].mxu0 %v269
  %v375 = vpop.f32.mrb[0].mxu0
  %v376 = vadd.f32 0.0, %v375
  %v377 = vpop.f32.mrb[0].mxu0
  %v378 = vpop.f32.mrb[0].mxu0
  %v379 = vadd.f32 0.0, %v378
  %v380 = vpop.f32.mrb[0].mxu0
  %381 = vmatprep.mubr.bf16.mxu0 0
  %382 = vmatmul.mubr.bf16.gmra.mrb[0].mxu0 %v270
  %v383 = vpop.f32.mrb[0].mxu0
  %v384 = vadd.f32 0.0, %v383
  %v385 = vpop.f32.mrb[0].mxu0
  %v386 = vpop.f32.mrb[0].mxu0
  %v387 = vadd.f32 0.0, %v386
  %v388 = vpop.f32.mrb[0].mxu0
  %389 = vmatprep.mubr.bf16.mxu0 0
  %390 = vmatmul.mubr.bf16.gmra.mrb[0].mxu0 %v271
  %v391 = vpop.f32.mrb[0].mxu0
  %v392 = vadd.f32 0.0, %v391
  %v393 = vpop.f32.mrb[0].mxu0
  %v394 = vpop.f32.mrb[0].mxu0
  %v395 = vadd.f32 0.0, %v394
  %v396 = vpop.f32.mrb[0].mxu0
  %397 = vmatprep.mubr.bf16.mxu0 0
  %398 = vmatmul.mubr.bf16.gmra.mrb[0].mxu0 %v272
  %v399 = vpop.f32.mrb[0].mxu0
  %v400 = vadd.f32 0.0, %v399
  %v401 = vpop.f32.mrb[0].mxu0
  %v402 = vpop.f32.mrb[0].mxu0
  %v403 = vadd.f32 0.0, %v402
  %v404 = vpop.f32.mrb[0].mxu0
  %405 = vmatprep.mubr.bf16.mxu0 0
  %406 = vmatmul.mubr.bf16.gmra.mrb[0].mxu0 %v273
  %v407 = vpop.f32.mrb[0].mxu0
  %v408 = vadd.f32 0.0, %v407
  %v409 = vpop.f32.mrb[0].mxu0
  %v410 = vpop.f32.mrb[0].mxu0
  %v411 = vadd.f32 0.0, %v410
  %v412 = vpop.f32.mrb[0].mxu0
  %413 = vmatprep.mubr.bf16.mxu0 0
  %414 = vmatmul.mubr.bf16.gmra.mrb[0].mxu0 %v274
  %v415 = vpop.f32.mrb[0].mxu0
  %v416 = vadd.f32 0.0, %v415
  %v417 = vpop.f32.mrb[0].mxu0
  %v418 = vpop.f32.mrb[0].mxu0
  %v419 = vadd.f32 0.0, %v418
  %v420 = vpop.f32.mrb[0].mxu0
  %421 = vmatprep.mubr.bf16.mxu0 0
  %422 = vmatmul.mubr.bf16.gmra.mrb[0].mxu0 %v275
  %v423 = vpop.f32.mrb[0].mxu0
  %v424 = vadd.f32 0.0, %v423
  %v425 = vpop.f32.mrb[0].mxu0
  %v426 = vpop.f32.mrb[0].mxu0
  %v427 = vadd.f32 0.0, %v426
  %v428 = vpop.f32.mrb[0].mxu0
  %429 = vmatprep.mubr.bf16.mxu0 0
  %430 = vmatmul.mubr.bf16.gmra.mrb[0].mxu0 %v276
  %v431 = vpop.f32.mrb[0].mxu0
  %v432 = vadd.f32 0.0, %v431
  %v433 = vpop.f32.mrb[0].mxu0
  %v434 = vpop.f32.mrb[0].mxu0
  %v435 = vadd.f32 0.0, %v434
  %v436 = vpop.f32.mrb[0].mxu0
  %437 = vdwg.mxu0
  %v438 = vpack.c.bf16 %v379, %v376
  %v439 = vpack.c.bf16 %v387, %v384
  %v440 = vpack.c.bf16 %v395, %v392
  %v441 = vpack.c.bf16 %v403, %v400
  %v442 = vpack.c.bf16 %v411, %v408
  %v443 = vpack.c.bf16 %v419, %v416
  %v444 = vpack.c.bf16 %v427, %v424
  %v445 = vpack.c.bf16 %v435, %v432
  %v446 = vld [vmem:[%s4] sm:$0x1]
  %v448 = vlaneseq
  %v449 = vshrl.u32 %v448, 7
  %v450 = vsub.s32 0, %v449
  %v451 = vrot.slane %v446, %v450
  %453 = vmatprep.subr.bf16.mxu0 0
  %454 = vmatpush1.bf16.msra.mxu0 %v438
  %455 = vmatprep.subr.bf16.mxu0 0
  %456 = vmatpush1.bf16.msra.mxu0 %v439
  %457 = vmatprep.subr.bf16.mxu0 0
  %458 = vmatpush1.bf16.msra.mxu0 %v440
  %459 = vmatprep.subr.bf16.mxu0 0
  %460 = vmatpush1.bf16.msra.mxu0 %v441
  %461 = vmatprep.subr.bf16.mxu0 0
  %462 = vmatpush1.bf16.msra.mxu0 %v442
  %463 = vmatprep.subr.bf16.mxu0 0
  %464 = vmatpush1.bf16.msra.mxu0 %v443
  %465 = vmatprep.subr.bf16.mxu0 0
  %466 = vmatpush1.bf16.msra.mxu0 %v444
  %467 = vmatprep.subr.bf16.mxu0 0
  %468 = vmatpush1.bf16.msra.mxu0 %v445
  %469 = vmatprep.subr.bf16.mxu0 0
  %470 = vmatpush1.bf16.msra.mxu0 0
  %471 = vmatprep.subr.bf16.mxu0 0
  %472 = vmatpush1.bf16.msra.mxu0 0
  %473 = vmatprep.subr.bf16.mxu0 0
  %474 = vmatpush1.bf16.msra.mxu0 0
  %475 = vmatprep.subr.bf16.mxu0 0
  %476 = vmatpush1.bf16.msra.mxu0 0
  %477 = vmatprep.subr.bf16.mxu0 0
  %478 = vmatpush1.bf16.msra.mxu0 0
  %479 = vmatprep.subr.bf16.mxu0 0
  %480 = vmatpush1.bf16.msra.mxu0 0
  %481 = vmatprep.subr.bf16.mxu0 0
  %482 = vmatpush1.bf16.msra.mxu0 0
  %483 = vmatprep.subr.bf16.mxu0 0
  %484 = vmatpush1.bf16.msra.mxu0 0
  %485 = vmatprep.mubr.bf16.mxu0 0
  %486 = vmatmul.mubr.bf16.gmra.mrb[0].mxu0 %v92
  %v487 = vpop.f32.mrb[0].mxu0
  %v488 = vadd.f32 %v451, %v487
  %v489 = vpop.f32.mrb[0].mxu0
  %v490 = vpop.f32.mrb[0].mxu0
  %v491 = vadd.f32 %v451, %v490
  %v492 = vpop.f32.mrb[0].mxu0
  %493 = vmatprep.mubr.bf16.mxu0 0
  %494 = vmatmul.mubr.bf16.gmra.mrb[0].mxu0 %v93
  %v495 = vpop.f32.mrb[0].mxu0
  %v496 = vadd.f32 %v451, %v495
  %v497 = vpop.f32.mrb[0].mxu0
  %v498 = vpop.f32.mrb[0].mxu0
  %v499 = vadd.f32 %v451, %v498
  %v500 = vpop.f32.mrb[0].mxu0
  %501 = vmatprep.mubr.bf16.mxu0 0
  %502 = vmatmul.mubr.bf16.gmra.mrb[0].mxu0 %v94
  %v503 = vpop.f32.mrb[0].mxu0
  %v504 = vadd.f32 %v451, %v503
  %v505 = vpop.f32.mrb[0].mxu0
  %v506 = vpop.f32.mrb[0].mxu0
  %v507 = vadd.f32 %v451, %v506
  %v508 = vpop.f32.mrb[0].mxu0
  %509 = vmatprep.mubr.bf16.mxu0 0
  %510 = vmatmul.mubr.bf16.gmra.mrb[0].mxu0 %v95
  %v511 = vpop.f32.mrb[0].mxu0
  %v512 = vadd.f32 %v451, %v511
  %v513 = vpop.f32.mrb[0].mxu0
  %v514 = vpop.f32.mrb[0].mxu0
  %v515 = vadd.f32 %v451, %v514
  %v516 = vpop.f32.mrb[0].mxu0
  %517 = vmatprep.mubr.bf16.mxu0 0
  %518 = vmatmul.mubr.bf16.gmra.mrb[0].mxu0 %v96
  %v519 = vpop.f32.mrb[0].mxu0
  %v520 = vadd.f32 %v451, %v519
  %v521 = vpop.f32.mrb[0].mxu0
  %v522 = vpop.f32.mrb[0].mxu0
  %v523 = vadd.f32 %v451, %v522
  %v524 = vpop.f32.mrb[0].mxu0
  %525 = vmatprep.mubr.bf16.mxu0 0
  %526 = vmatmul.mubr.bf16.gmra.mrb[0].mxu0 %v97
  %v527 = vpop.f32.mrb[0].mxu0
  %v528 = vadd.f32 %v451, %v527
  %v529 = vpop.f32.mrb[0].mxu0
  %v530 = vpop.f32.mrb[0].mxu0
  %v531 = vadd.f32 %v451, %v530
  %v532 = vpop.f32.mrb[0].mxu0
  %533 = vmatprep.mubr.bf16.mxu0 0
  %534 = vmatmul.mubr.bf16.gmra.mrb[0].mxu0 %v98
  %v535 = vpop.f32.mrb[0].mxu0
  %v536 = vadd.f32 %v451, %v535
  %v537 = vpop.f32.mrb[0].mxu0
  %v538 = vpop.f32.mrb[0].mxu0
  %v539 = vadd.f32 %v451, %v538
  %v540 = vpop.f32.mrb[0].mxu0
  %541 = vmatprep.mubr.bf16.mxu0 0
  %542 = vmatmul.mubr.bf16.gmra.mrb[0].mxu0 %v99
  %v543 = vpop.f32.mrb[0].mxu0
  %v544 = vadd.f32 %v451, %v543
  %v545 = vpop.f32.mrb[0].mxu0
  %v546 = vpop.f32.mrb[0].mxu0
  %v547 = vadd.f32 %v451, %v546
  %v548 = vpop.f32.mrb[0].mxu0
  %549 = vdwg.mxu0
  %550 = vst [vmem:[%s5] sm:$0xff] %v488
  %551 = vst [vmem:[%s5 + $0x8] sm:$0xff] %v491
  %552 = vst [vmem:[%s5 + $0x10] sm:$0xff] %v496
  %553 = vst [vmem:[%s5 + $0x18] sm:$0xff] %v499
  %554 = vst [vmem:[%s5 + $0x20] sm:$0xff] %v504
  %555 = vst [vmem:[%s5 + $0x28] sm:$0xff] %v507
  %556 = vst [vmem:[%s5 + $0x30] sm:$0xff] %v512
  %557 = vst [vmem:[%s5 + $0x38] sm:$0xff] %v515
  %558 = vst [vmem:[%s5 + $0x40] sm:$0xff] %v520
  %559 = vst [vmem:[%s5 + $0x48] sm:$0xff] %v523
  %560 = vst [vmem:[%s5 + $0x50] sm:$0xff] %v528
  %561 = vst [vmem:[%s5 + $0x58] sm:$0xff] %v531
  %562 = vst [vmem:[%s5 + $0x60] sm:$0xff] %v536
  %563 = vst [vmem:[%s5 + $0x68] sm:$0xff] %v539
  %564 = vst [vmem:[%s5 + $0x70] sm:$0xff] %v544
  %565 = vst [vmem:[%s5 + $0x78] sm:$0xff] %v547
  // Predicated region
  $region22: #{_gcn_forward_impl.1} parent=0 // pred_check
    _
  $region23: #{_gcn_forward_impl.1} parent=0 // pred_check_branch
    %567 = sbr.rel (0) target = $region25
  $region24: #{_gcn_forward_impl.1} parent=0 // pred_region
    _
  $region25: #{_gcn_forward_impl.1} parent=0 // pred_fallthru
    _
  // Predicated region
  $region26: #{_gcn_forward_impl.1} parent=0 // pred_check
    _
  $region27: #{_gcn_forward_impl.1} parent=0 // pred_check_branch
    %569 = sbr.rel (0) target = $region29
  $region28: #{_gcn_forward_impl.1} parent=0 // pred_region
    _
  $region29: #{_gcn_forward_impl.1} parent=0 // pred_fallthru
    _

</llo_original>
